<compile_context>
chip_gen: v5e
topology: v5e:2x2
jax: 0.10.0
libtpu: 0.0.40
codegen_flags: <defaults>
</compile_context>

<pallas_src>
import functools
import math

import jax
import jax.numpy as jnp
from jax.experimental import pallas as pl
from jax.experimental.pallas import tpu as pltpu


# Per-buffer tile budget, measured in f32-expanded bytes (the kernel casts to
# f32 and squares, so the compute footprint is f32 regardless of input dtype).
_TILE_TARGET_BYTES = 8 * 1024 * 1024
# Scoped VMEM: double-buffered input (<=16 MiB) + f32 x / x*x temporaries
# (<=16 MiB) + headroom.  Safe on v7x's 64 MiB physical per-TC VMEM.
_VMEM_LIMIT_BYTES = 48 * 1024 * 1024
# Cap on the packed lane width so the indicator matrix stays tiny.
_MAX_PACKED_LANES = 512


def _round_down(x: int, m: int) -> int:
    return (x // m) * m


def _l2_kernel(*refs, valid_rows, tile_rows, tiles_per_split, use_mxu):
    if use_mxu:
        scale_ref, seg_ref, x_ref, o_ref, acc_ref = refs
    else:
        scale_ref, x_ref, o_ref, acc_ref = refs
        seg_ref = None

    c = pl.program_id(0)          # "parallel" split axis (2nd TC on v7x)
    i = pl.program_id(1)          # row-tile reduction axis ("arbitrary")

    @pl.when(i == 0)
    def _init():
        acc_ref[...] = jnp.zeros_like(acc_ref)

    x = x_ref[...].astype(jnp.float32)                  # (tile_rows, lane_d)
    sq = x * x

    if use_mxu:
        # Per-row (segmented) sum of squares on the MXU: matmul against a
        # resident ones column (pack==1) or indicator matrix (pack>1).  The
        # push uses the vector-extended slot, leaving VPU/XLU free, so the
        # kernel stays HBM-bound instead of XLU-bound for D ~ 128-512.
        ssq = jnp.dot(sq, seg_ref[...], preferred_element_type=jnp.float32)
    else:
        # Narrow / non-128-multiple lane widths: plain XLU lane reduce.
        ssq = jnp.sum(sq, axis=-1, keepdims=True)       # (tile_rows, 1)

    norms = jnp.sqrt(ssq)                               # (tile_rows, pack)

    tile_idx = c * tiles_per_split + i                  # global tile id
    row0 = tile_idx * tile_rows
    is_edge = row0 + tile_rows > valid_rows             # ragged last block only

    @pl.when(jnp.logical_not(is_edge))
    def _accumulate_full():
        acc_ref[...] += jnp.sum(norms).reshape(1, 1)

    @pl.when(is_edge)
    def _accumulate_edge():
        # Mask stale rows of the partial tail block.  Mask AFTER sqrt: where()
        # is a select, so Inf/NaN from stale VMEM never propagates.
        rid = row0 + jax.lax.broadcasted_iota(jnp.int32, norms.shape, 0)
        masked = jnp.where(rid < valid_rows, norms, 0.0)
        acc_ref[...] += jnp.sum(masked).reshape(1, 1)

    @pl.when(i == pl.num_programs(1) - 1)
    def _finalize():
        o_ref[...] = acc_ref[...] * scale_ref[0]        # weight * mean partial


def l2_regularizer(factor: jax.Array, weight: float) -> jax.Array:
    """Pallas equivalent of L2.forward: weight * mean(torch.norm(factor, dim=-1))."""
    d = factor.shape[-1]
    x2d = factor.reshape(-1, d)
    r_logical = x2d.shape[0]
    if r_logical == 0:
        return jnp.float32(jnp.nan)   # torch.mean over an empty set -> nan

    # Lane-pack small D so loads are lane-dense.  Generalized packing:
    # pack = lcm(d, 128) // d (lane_d = lcm(d, 128) is always a 128-multiple).
    pack = 1
    lane_d = d
    if d < 128:
        lcm = d * 128 // math.gcd(d, 128)
        cand_pack = lcm // d
        if lcm <= _MAX_PACKED_LANES and r_logical % cand_pack == 0:
            pack = cand_pack
            lane_d = lcm
            x2d = x2d.reshape(r_logical // pack, lane_d)
    rows = x2d.shape[0]               # (packed) rows the kernel iterates over

    # MXU row-reduce only when the logical lane width is a 128-multiple (all
    # packed paths are); otherwise fall back to the XLU lane reduce.
    use_mxu = (lane_d % 128 == 0)

    itemsize = x2d.dtype.itemsize
    sub = max(8, 32 // itemsize)      # min sublane tile: f32=8, bf16=16, int8=32
    lane_padded = pl.cdiv(lane_d, 128) * 128
    # Size tiles by the f32 compute footprint (astype + x*x temporaries), not
    # the native itemsize -> no VMEM blow-up for bf16/int8 inputs.
    f32_bytes_per_row = lane_padded * 4

    if rows <= sub:
        tile_rows = rows              # full-extent block (exempt from 8-divisibility)
    else:
        max_tr = _round_down(rows, sub)
        tile_rows = max(sub, _round_down(
            min(_TILE_TARGET_BYTES // f32_bytes_per_row, max_tr), sub))
    n_tiles = pl.cdiv(rows, tile_rows)
    # TODO(synk): for extremely large D (>= ~2M f32 lanes) an inner D-grid axis
    # would be needed to keep a single row-tile within VMEM.

    # 2-way "parallel" split only when the tile count is (or can be made) even:
    # single-TC chips never DMA a wasted clamped tile, and v7x halves balance.
    num_splits = 1
    if n_tiles >= 2:
        if n_tiles % 2 == 0:
            num_splits = 2
        else:
            cand = max(sub, min(tile_rows, pl.cdiv(pl.cdiv(rows, n_tiles + 1), sub) * sub))
            n_cand = pl.cdiv(rows, cand)
            if n_cand % 2 == 0 and n_cand >= 2:
                tile_rows, n_tiles, num_splits = cand, n_cand, 2
    tiles_per_split = n_tiles // num_splits

    def x_index_map(c, i):
        return (c * tiles_per_split + i, 0)

    scale = jnp.asarray([weight / r_logical], dtype=jnp.float32)

    kernel = functools.partial(
        _l2_kernel,
        valid_rows=rows,
        tile_rows=tile_rows,
        tiles_per_split=tiles_per_split,
        use_mxu=use_mxu,
    )

    in_specs = [pl.BlockSpec(memory_space=pltpu.MemorySpace.SMEM)]   # scale (1,)
    args = [scale]
    if use_mxu:
        # Resident ones column / segment-indicator matrix (hoisted constant;
        # constant index_map => fetched once, never rebuilt per grid step).
        if pack == 1:
            seg = jnp.ones((lane_d, 1), jnp.float32)
        else:
            row_i = jnp.arange(lane_d, dtype=jnp.int32)[:, None]
            col_i = jnp.arange(pack, dtype=jnp.int32)[None, :]
            seg = (row_i // d == col_i).astype(jnp.float32)
        in_specs.append(pl.BlockSpec(seg.shape, lambda c, i: (0, 0)))
        args.append(seg)
    in_specs.append(pl.BlockSpec((tile_rows, lane_d), x_index_map))  # rows slab
    args.append(x2d)

    out = pl.pallas_call(
        kernel,
        out_shape=jax.ShapeDtypeStruct((num_splits, 1), jnp.float32),
        grid_spec=pltpu.PrefetchScalarGridSpec(
            num_scalar_prefetch=0,
            grid=(num_splits, tiles_per_split),
            in_specs=in_specs,
            out_specs=pl.BlockSpec((1, 1), lambda c, i: (c, 0)),
            scratch_shapes=[pltpu.VMEM((1, 1), jnp.float32)],
        ),
        compiler_params=pltpu.CompilerParams(
            dimension_semantics=("parallel", "arbitrary"),
            vmem_limit_bytes=_VMEM_LIMIT_BYTES,
        ),
    )(*args)

    return jnp.sum(out)


def _ref(factor, weight):
    return weight * jnp.mean(
        jnp.sqrt(jnp.sum(factor.astype(jnp.float32) ** 2, axis=-1)))


if __name__ == "__main__":
    key = jax.random.PRNGKey(0)
    weight = 0.01

    # Primary demo: (batch=2, seq=8, hidden=32) -> lane-packed MXU path (pack=4).
    factor = jax.random.normal(key, (2, 8, 32), dtype=jnp.float32)
    result = jax.block_until_ready(l2_regularizer(factor, weight))
    ref = _ref(factor, weight)
    assert jnp.allclose(result, ref, rtol=1e-5, atol=1e-6), (result, ref)

    # Un-packed XLU path (D=96 not a 128-multiple) with a masked partial tail
    # tile and a balanced 2-way split.
    k1, k2 = jax.random.split(key)
    f2 = jax.random.normal(k1, (3, 5, 96), dtype=jnp.float32)   # 15 rows, D=96
    r2 = jax.block_until_ready(l2_regularizer(f2, weight))
    assert jnp.allclose(r2, _ref(f2, weight), rtol=1e-5, atol=1e-6), (r2, _ref(f2, weight))

    # Native bf16 path, MXU ones-column reduce (D=256).
    f3 = jax.random.normal(k2, (7, 256), dtype=jnp.bfloat16)
    r3 = jax.block_until_ready(l2_regularizer(f3, weight))
    assert jnp.allclose(r3, _ref(f3, weight), rtol=2e-2, atol=1e-3), (r3, _ref(f3, weight))

    print("KERNEL_OK")
</pallas_src>

<mosaic_0001>
module attributes {stable_mosaic.version = 11 : i64} {
  func.func @_l2_kernel(%arg0: i32, %arg1: i32, %arg2: memref<1xf32, #tpu.memory_space<smem>>, %arg3: memref<128x4xf32, #tpu.memory_space<vmem>>, %arg4: memref<4x128xf32, #tpu.memory_space<vmem>>, %arg5: memref<1x1xf32, #tpu.memory_space<vmem>>, %arg6: memref<1x1xf32, #tpu.memory_space<vmem>>) attributes {dimension_semantics = [#tpu.dimension_semantics<parallel>, #tpu.dimension_semantics<arbitrary>], iteration_bounds = array<i64: 1, 1>, scalar_prefetch = 0 : i64, scratch_operands = 1 : i64, tpu.core_type = #tpu.core_type<tc>, window_params = [{transform_indices = @transform_0, window_bounds = array<i64: 1>}, {pipeline_mode = #tpu.pipeline_mode<synchronous>, transform_indices = @transform_1, window_bounds = array<i64: 128, 4>}, {transform_indices = @transform_2, window_bounds = array<i64: 4, 128>}, {transform_indices = @transform_3, window_bounds = array<i64: 1, 1>}]} {
    %c0_i32 = arith.constant 0 : i32
    %0 = arith.cmpi eq, %arg1, %c0_i32 : i32
    %1 = arith.extui %0 : i1 to i32
    %c0_i32_0 = arith.constant 0 : i32
    %2 = arith.cmpi ne, %1, %c0_i32_0 : i32
    scf.if %2 {
      %cst_10 = arith.constant 0.000000e+00 : f32
      %21 = vector.broadcast %cst_10 : f32 to vector<1x1xf32>
      %c0_11 = arith.constant 0 : index
      %c0_12 = arith.constant 0 : index
      %22 = vector.load %arg6[%c0_11, %c0_12] : memref<1x1xf32, #tpu.memory_space<vmem>>, vector<1x1xf32>
      tpu.vector_store %arg6[%c0_11, %c0_12], %21 {strides = array<i32>} : memref<1x1xf32, #tpu.memory_space<vmem>>, vector<1x1xf32>,
    } else {
    }
    %c0 = arith.constant 0 : index
    %c0_1 = arith.constant 0 : index
    %3 = vector.load %arg4[%c0, %c0_1] : memref<4x128xf32, #tpu.memory_space<vmem>>, vector<4x128xf32>
    %4 = arith.mulf %3, %3 : vector<4x128xf32>
    %c0_2 = arith.constant 0 : index
    %c0_3 = arith.constant 0 : index
    %5 = vector.load %arg3[%c0_2, %c0_3] : memref<128x4xf32, #tpu.memory_space<vmem>>, vector<128x4xf32>
    %cst = arith.constant dense<0.000000e+00> : vector<4x4xf32>
    %6 = tpu.matmul %4, %5, %cst {dimension_numbers = #tpu.dot_dimension_numbers<[1], [0], [0], [1], [0, 0, 1, 1], [], []>} : vector<4x128xf32>, vector<128x4xf32>, vector<4x4xf32> -> vector<4x4xf32>
    %7 = math.sqrt %6 : vector<4x4xf32>
    %c1_i32 = arith.constant 1 : i32
    %8 = arith.muli %arg0, %c1_i32 : i32
    %9 = arith.addi %8, %arg1 : i32
    %c4_i32 = arith.constant 4 : i32
    %10 = arith.muli %9, %c4_i32 : i32
    %c4_i32_4 = arith.constant 4 : i32
    %11 = arith.addi %10, %c4_i32_4 : i32
    %c4_i32_5 = arith.constant 4 : i32
    %12 = arith.cmpi sgt, %11, %c4_i32_5 : i32
    %true = arith.constant true
    %13 = arith.xori %12, %true : i1
    %14 = arith.extui %13 : i1 to i32
    %c0_i32_6 = arith.constant 0 : i32
    %15 = arith.cmpi ne, %14, %c0_i32_6 : i32
    scf.if %15 {
      %c0_10 = arith.constant 0 : index
      %c0_11 = arith.constant 0 : index
      %21 = vector.load %arg6[%c0_10, %c0_11] : memref<1x1xf32, #tpu.memory_space<vmem>>, vector<1x1xf32>
      %22 = vector.shape_cast %7 : vector<4x4xf32> to vector<1x4x4xf32>
      %cst_12 = arith.constant dense<0.000000e+00> : vector<1xf32>
      %23 = vector.multi_reduction <add>, %22, %cst_12 [1, 2] : vector<1x4x4xf32> to vector<1xf32>
      %24 = vector.shape_cast %23 : vector<1xf32> to vector<1x1x1xf32>
      %25 = vector.extract %24[0, 0, 0] : f32 from vector<1x1x1xf32>
      %26 = vector.broadcast %25 : f32 to vector<1x1xf32>
      %27 = arith.addf %21, %26 : vector<1x1xf32>
      %c0_13 = arith.constant 0 : index
      %c0_14 = arith.constant 0 : index
      %28 = vector.load %arg6[%c0_13, %c0_14] : memref<1x1xf32, #tpu.memory_space<vmem>>, vector<1x1xf32>
      tpu.vector_store %arg6[%c0_13, %c0_14], %27 {strides = array<i32>} : memref<1x1xf32, #tpu.memory_space<vmem>>, vector<1x1xf32>,
    } else {
    }
    %16 = arith.extui %12 : i1 to i32
    %c0_i32_7 = arith.constant 0 : i32
    %17 = arith.cmpi ne, %16, %c0_i32_7 : i32
    scf.if %17 {
      %21 = tpu.iota {dimensions = array<i32: 0>} : vector<4x4xi32>
      %22 = vector.broadcast %10 : i32 to vector<4x4xi32>
      %23 = arith.addi %22, %21 : vector<4x4xi32>
      %c4_i32_10 = arith.constant 4 : i32
      %24 = vector.broadcast %c4_i32_10 : i32 to vector<4x4xi32>
      %25 = arith.cmpi slt, %23, %24 : vector<4x4xi32>
      %cst_11 = arith.constant 0.000000e+00 : f32
      %26 = vector.broadcast %cst_11 : f32 to vector<4x4xf32>
      %27 = arith.select %25, %7, %26 : vector<4x4xi1>, vector<4x4xf32>
      %c0_12 = arith.constant 0 : index
      %c0_13 = arith.constant 0 : index
      %28 = vector.load %arg6[%c0_12, %c0_13] : memref<1x1xf32, #tpu.memory_space<vmem>>, vector<1x1xf32>
      %29 = vector.shape_cast %27 : vector<4x4xf32> to vector<1x4x4xf32>
      %cst_14 = arith.constant dense<0.000000e+00> : vector<1xf32>
      %30 = vector.multi_reduction <add>, %29, %cst_14 [1, 2] : vector<1x4x4xf32> to vector<1xf32>
      %31 = vector.shape_cast %30 : vector<1xf32> to vector<1x1x1xf32>
      %32 = vector.extract %31[0, 0, 0] : f32 from vector<1x1x1xf32>
      %33 = vector.broadcast %32 : f32 to vector<1x1xf32>
      %34 = arith.addf %28, %33 : vector<1x1xf32>
      %c0_15 = arith.constant 0 : index
      %c0_16 = arith.constant 0 : index
      %35 = vector.load %arg6[%c0_15, %c0_16] : memref<1x1xf32, #tpu.memory_space<vmem>>, vector<1x1xf32>
      tpu.vector_store %arg6[%c0_15, %c0_16], %34 {strides = array<i32>} : memref<1x1xf32, #tpu.memory_space<vmem>>, vector<1x1xf32>,
    } else {
    }
    %c0_i32_8 = arith.constant 0 : i32
    %18 = arith.cmpi eq, %arg1, %c0_i32_8 : i32
    %19 = arith.extui %18 : i1 to i32
    %c0_i32_9 = arith.constant 0 : i32
    %20 = arith.cmpi ne, %19, %c0_i32_9 : i32
    scf.if %20 {
      %c0_10 = arith.constant 0 : index
      %c0_11 = arith.constant 0 : index
      %21 = vector.load %arg6[%c0_10, %c0_11] : memref<1x1xf32, #tpu.memory_space<vmem>>, vector<1x1xf32>
      %c0_12 = arith.constant 0 : index
      %22 = memref.load %arg2[%c0_12] : memref<1xf32, #tpu.memory_space<smem>>
      %23 = vector.broadcast %22 : f32 to vector<1x1xf32>
      %24 = arith.mulf %21, %23 : vector<1x1xf32>
      %c0_13 = arith.constant 0 : index
      %c0_14 = arith.constant 0 : index
      %25 = vector.load %arg5[%c0_13, %c0_14] : memref<1x1xf32, #tpu.memory_space<vmem>>, vector<1x1xf32>
      tpu.vector_store %arg5[%c0_13, %c0_14], %24 {strides = array<i32>} : memref<1x1xf32, #tpu.memory_space<vmem>>, vector<1x1xf32>,
    } else {
    }
    return
  }
  func.func @transform_0(%arg0: i32, %arg1: i32) -> i32 {
    %c0_i32 = arith.constant 0 : i32
    %c0_i32_0 = arith.constant 0 : i32
    return %c0_i32 : i32
  }
  func.func @transform_1(%arg0: i32, %arg1: i32) -> (i32, i32) {
    %c0_i32 = arith.constant 0 : i32
    %c0_i32_0 = arith.constant 0 : i32
    %c0_i32_1 = arith.constant 0 : i32
    return %c0_i32, %c0_i32_0 : i32, i32
  }
  func.func @transform_2(%arg0: i32, %arg1: i32) -> (i32, i32) {
    %c1_i32 = arith.constant 1 : i32
    %0 = arith.muli %arg0, %c1_i32 : i32
    %1 = arith.addi %0, %arg1 : i32
    %c0_i32 = arith.constant 0 : i32
    %c0_i32_0 = arith.constant 0 : i32
    return %1, %c0_i32 : i32, i32
  }
  func.func @transform_3(%arg0: i32, %arg1: i32) -> (i32, i32) {
    %c0_i32 = arith.constant 0 : i32
    %c0_i32_0 = arith.constant 0 : i32
    return %arg0, %c0_i32 : i32, i32
  }
}

</mosaic_0001>

<llo_original>
// kernel: tpu_custom_call.1
$region0: #{tpu_custom_call.1}
  #allocation0 [shape = 'u32[]', space=smem, size = 0x4, offset = 0x4, fixed_abs, tag = 'smem constant byte address 0x4 - core index']
  #allocation1 [shape = 'u32[72,128]{1,0:T(1,128)}', space=vmem, size = 0x9000, scoped, tag = 'internal scratch']
  #allocation2 [shape = 'f32[1,1]{1,0:T(1,128)}', space=vmem, size = 0x200, scoped, tag = 'scratch operand']
  #allocation3 [shape = 'f32[1]{0:T(128)S(6)}', space=smem, size = 0x200, scoped, tag = 'scoped memory for tpu_custom_call.1']
  %s0 = inlined_call_operand.<no memory space> [shape: f32[1], index: 0, kind: input, shape index: {}]
  %s1 = inlined_call_operand.vmem [shape: f32[128,4], index: 1, kind: input, shape index: {}]
  %s2 = inlined_call_operand.vmem [shape: f32[4,128], index: 2, kind: input, shape index: {}]
  %s3 = inlined_call_operand.hbm [shape: f32[1,1], index: 3, kind: output, shape index: {}]
  %s4 = sld [smem:[#allocation0]]
  $region38: #{tpu_custom_call.1} parent=0
    _
  %s6 = ssub.s32 1, %s4
  %s7 = scalar_select 0, %s6, %s4
  %8 = sst [smem:[#allocation3]] %s0
  $region1: #{tpu_custom_call.1} parent=0
    #allocation4 [shape = 'u8[512]{0}', space=vmem, size = 0x400, scoped, tag = 'output window, operand 0, single buffered']
    #allocation5 [shape = 's32[1]{0}', space=sflag, size = 0x4, scoped, tag = 'scoped memory for tpu_custom_call.1']
    %9 = vsyncpa [#allocation5], 0
    // Predicated region
    $region2: #{tpu_custom_call.1} parent=1 // pred_check
      _
    $region3: #{tpu_custom_call.1} parent=1 // pred_check_branch
      %11 = sbr.rel (0) target = $region5
    $region4: #{tpu_custom_call.1} parent=1 // pred_region
      _
    $region5: #{tpu_custom_call.1} parent=1 // pred_fallthru
      _
    // Predicated region
    $region6: #{tpu_custom_call.1} parent=1 // pred_check
      _
    $region7: #{tpu_custom_call.1} parent=1 // pred_check_branch
      %13 = sbr.rel (0) target = $region9
    $region8: #{tpu_custom_call.1} parent=1 // pred_region
      _
    $region9: #{tpu_custom_call.1} parent=1 // pred_fallthru
      _
    // Predicated region
    $region10: #{tpu_custom_call.1} parent=1 // pred_check
      _
    $region11: #{tpu_custom_call.1} parent=1 // pred_check_branch
      %15 = sbr.rel (0) target = $region13
    $region12: #{tpu_custom_call.1} parent=1 // pred_region
      %s16 = sadd.s32 0, 0
      %p17 = scmp.lt.s32.totalorder %s16, 0
      %s18 = scalar_select %p17, %s16, 0
      %s19 = smul.addr %s18, 4
      %s20 = scalar_lea.vmem %s2, %s19
      %s21 = sadd.s32 0, 0
    $region13: #{tpu_custom_call.1} parent=1 // pred_fallthru
      _
    %s22 = sadd.s32 0, 0
    %p23 = scmp.lt.s32.totalorder %s22, 0
    %s24 = scalar_select %p23, %s22, 0
    %s25 = smul.addr %s24, 4
    %s26 = scalar_lea.vmem %s2, %s25
    %s27 = sadd.s32 0, 0
    %p28 = scmp.lt.s32.totalorder %s27, 0
    %s29 = scalar_select %p28, %s27, 0
    %s30 = smul.addr %s29, 4
    %s31 = scalar_lea.vmem %s2, %s30
    %s32 = sadd.s32 0, 0
    %p33 = scmp.eq.s32.totalorder 0, 0
    // Predicated region
    $region14: #{tpu_custom_call.1} parent=1 // pred_check
      %p34 = pneg %p33
    $region15: #{tpu_custom_call.1} parent=1 // pred_check_branch
      %36 = sbr.rel (%p34) target = $region17
    $region16: #{tpu_custom_call.1} parent=1 // pred_region
      %vm37 = vcmask 0
      %38 = vst.msk [vmem:[#allocation2] sm:$0x1] %vm37, 0.0
    $region17: #{tpu_custom_call.1} parent=1 // pred_fallthru
      _
    %v39 = vld [vmem:[%s31] sm:$0xf]
    %v40 = vmul.f32 %v39, %v39
    %v41 = vld [vmem:[%s1] sm:$0xff]
    %v42 = vld [vmem:[%s1 + $0x8] sm:$0xff]
    %v43 = vld [vmem:[%s1 + $0x10] sm:$0xff]
    %v44 = vld [vmem:[%s1 + $0x18] sm:$0xff]
    %v45 = vld [vmem:[%s1 + $0x20] sm:$0xff]
    %v46 = vld [vmem:[%s1 + $0x28] sm:$0xff]
    %v47 = vld [vmem:[%s1 + $0x30] sm:$0xff]
    %v48 = vld [vmem:[%s1 + $0x38] sm:$0xff]
    %v49 = vld [vmem:[%s1 + $0x40] sm:$0xff]
    %v50 = vld [vmem:[%s1 + $0x48] sm:$0xff]
    %v51 = vld [vmem:[%s1 + $0x50] sm:$0xff]
    %v52 = vld [vmem:[%s1 + $0x58] sm:$0xff]
    %v53 = vld [vmem:[%s1 + $0x60] sm:$0xff]
    %v54 = vld [vmem:[%s1 + $0x68] sm:$0xff]
    %v55 = vld [vmem:[%s1 + $0x70] sm:$0xff]
    %v56 = vld [vmem:[%s1 + $0x78] sm:$0xff]
    %57 = vmatpush.msra.mxu0 %v56
    %58 = vmatpush.msra.mxu0 %v55
    %59 = vmatpush.msra.mxu0 %v54
    %60 = vmatpush.msra.mxu0 %v53
    %61 = vmatpush.msra.mxu0 %v52
    %62 = vmatpush.msra.mxu0 %v51
    %63 = vmatpush.msra.mxu0 %v50
    %64 = vmatpush.msra.mxu0 %v49
    %65 = vmatpush.msra.mxu0 %v48
    %66 = vmatpush.msra.mxu0 %v47
    %67 = vmatpush.msra.mxu0 %v46
    %68 = vmatpush.msra.mxu0 %v45
    %69 = vmatpush.msra.mxu0 %v44
    %70 = vmatpush.msra.mxu0 %v43
    %71 = vmatpush.msra.mxu0 %v42
    %72 = vmatpush.msra.mxu0 %v41
    %73 = vmatmul.f32.gmra.mxu0 %v40
    %v74 = vpop.f32.mrf.mxu0
    %v75 = vadd.f32 0.0, %v74
    %76 = vdwg.mxu0
    %v77 = vrsqrt.pop %v75
    %v78 = vmul.f32 %v77, %v75
    %v79 = vmul.f32 %v78, %v77
    %v80 = vmul.f32 0.5, %v79
    %v81 = vsub.f32 1.5, %v80
    %v82 = vmul.f32 %v77, %v81
    %v83 = vmul.f32 %v75, %v82
    %vm84 = vcmp.eq.f32.partialorder %v75, inf
    %v85 = vsel %vm84, %v75, %v83
    %vm86 = vcmp.eq.f32.partialorder %v75, 0.0
    %v87 = vand.u32 %v75, 2147483648
    %v88 = vsel %vm86, %v87, %v85
    %s89 = sadd.s32 0, 0
    %s90 = smul.u32 %s89, 4
    %s91 = sadd.s32 %s90, 4
    %p92 = scmp.gt.s32.totalorder %s91, 4
    %p93 = scmp.le.s32.totalorder %s91, 4
    // Predicated region
    $region18: #{tpu_custom_call.1} parent=1 // pred_check
      %p94 = pneg %p93
    $region19: #{tpu_custom_call.1} parent=1 // pred_check_branch
      %96 = sbr.rel (%p94) target = $region21
    $region20: #{tpu_custom_call.1} parent=1 // pred_region
      %v97 = vld [vmem:[#allocation2] sm:$0x1]
      %vm98 = vcmask 27648
      %v99 = vsel %vm98, %v88, 0.0
      %100 = vadd.xlane.f32.xlu0 %v99
      %v101 = vpop.xlane.xlu0 %100
      %v102 = vrot.slane %v101, 4
      %v103 = vadd.f32 %v101, %v102
      %v104 = vrot.slane %v103, 2
      %v105 = vadd.f32 %v103, %v104
      %v106 = vrot.slane %v105, 1
      %v107 = vadd.f32 %v105, %v106
      %s108 = vtos %v107
      %v109 = vstv %s108
      %v110 = vadd.f32 %v97, %v109
      %vm111 = vcmask 0
      %112 = vst.msk [vmem:[#allocation2] sm:$0x1] %vm111, %v110
    $region21: #{tpu_custom_call.1} parent=1 // pred_fallthru
      _
    // Predicated region
    $region22: #{tpu_custom_call.1} parent=1 // pred_check
      %p113 = pneg %p92
    $region23: #{tpu_custom_call.1} parent=1 // pred_check_branch
      %115 = sbr.rel (%p113) target = $region25
    $region24: #{tpu_custom_call.1} parent=1 // pred_region
      %v116 = vlaneseq
      %v117 = vshrl.u32 %v116, 7
      %v118 = vstv %s90
      %v119 = vadd.s32 %v118, %v117
      %vm120 = vcmp.lt.s32.totalorder %v119, 4
      %v121 = vsel %vm120, %v88, 0.0
      %v122 = vld [vmem:[#allocation2] sm:$0x1]
      %vm123 = vcmask 27648
      %v124 = vsel %vm123, %v121, 0.0
      %125 = vadd.xlane.f32.xlu0 %v124
      %v126 = vpop.xlane.xlu0 %125
      %v127 = vrot.slane %v126, 4
      %v128 = vadd.f32 %v126, %v127
      %v129 = vrot.slane %v128, 2
      %v130 = vadd.f32 %v128, %v129
      %v131 = vrot.slane %v130, 1
      %v132 = vadd.f32 %v130, %v131
      %s133 = vtos %v132
      %v134 = vstv %s133
      %v135 = vadd.f32 %v122, %v134
      %vm136 = vcmask 0
      %137 = vst.msk [vmem:[#allocation2] sm:$0x1] %vm136, %v135
    $region25: #{tpu_custom_call.1} parent=1 // pred_fallthru
      _
    // Predicated region
    $region26: #{tpu_custom_call.1} parent=1 // pred_check
      %p138 = pneg %p33
    $region27: #{tpu_custom_call.1} parent=1 // pred_check_branch
      %140 = sbr.rel (%p138) target = $region29
    $region28: #{tpu_custom_call.1} parent=1 // pred_region
      %v141 = vld [vmem:[#allocation2] sm:$0x1]
      %s142 = sld [smem:[#allocation3]]
      %v143 = vstv %s142
      %v144 = vmul.f32 %v141, %v143
      %vm145 = vcmask 0
      %146 = vst.msk [vmem:[#allocation4] sm:$0x1] %vm145, %v144
    $region29: #{tpu_custom_call.1} parent=1 // pred_fallthru
      _
    // Predicated region
    $region30: #{tpu_custom_call.1} parent=1 // pred_check
      _
    $region31: #{tpu_custom_call.1} parent=1 // pred_check_branch
      %148 = sbr.rel (0) target = $region33
    $region32: #{tpu_custom_call.1} parent=1 // pred_region
      %150 = vsyncadd [#allocation5], 0
      %s152 = sshll.u32 [#allocation4], 4
      %s153 = int_to_ptr.vmem [resolvable:$true] %s152
      %s154 = sshll.u32 %s3, 4
      %s155 = int_to_ptr.hbm [resolvable:$true] %s154
      %157 = dma.vmem_to_hbm [thread:$0]  %s153, 16, %s155, [#allocation5]
    $region33: #{tpu_custom_call.1} parent=1 // pred_fallthru
      _
    // Predicated region
    $region34: #{tpu_custom_call.1} parent=1 // pred_check
      _
    $region35: #{tpu_custom_call.1} parent=1 // pred_check_branch
      %159 = sbr.rel (0) target = $region37
    $region36: #{tpu_custom_call.1} parent=1 // pred_region
      %161 = dma.done [#allocation5], 16
    $region37: #{tpu_custom_call.1} parent=1 // pred_fallthru
      _
    %162 = vsyncpa [#allocation5], 1

</llo_original>
